<compile_context>
chip_gen: v5e
topology: v5e:2x2
jax: 0.10.0
libtpu: 0.0.40
codegen_flags: <defaults>
</compile_context>

<pallas_src>
import math

import jax
import jax.numpy as jnp
from jax.experimental import pallas as pl
from jax.experimental.pallas import tpu as pltpu

_IN, _H1, _H2, _OUT = 9, 3, 3, 1
_LANES = 128
_STRIP = 16                      # sublane rows per inner-loop iteration (2048 batch rows)
_QUANTUM = _STRIP * _LANES       # batch rows per tile must be a multiple of this


def _mlp_kernel(x_ref, w1_ref, b1_ref, w2_ref, b2_ref, w3_ref, b3_ref, o_ref):
    """x_ref: (9, tb, 128) VMEM; weights/biases flat f32 in SMEM; o_ref: (tb, 128)."""
    # Hoist the tiny parameter tensors into scalar registers once per block.
    w1 = [w1_ref[i] for i in range(_H1 * _IN)]
    b1 = [b1_ref[i] for i in range(_H1)]
    w2 = [w2_ref[i] for i in range(_H2 * _H1)]
    b2 = [b2_ref[i] for i in range(_H2)]
    w3 = [w3_ref[i] for i in range(_OUT * _H2)]
    b3 = [b3_ref[i] for i in range(_OUT)]

    def dense(rows_in, w, b, n_out, n_in, relu):
        # Unrolled VPU multiply-accumulate: each weight is a scalar broadcast
        # over a batch-dense (STRIP, 128) block.  No MXU involvement.
        outs = []
        for o in range(n_out):
            acc = rows_in[0] * w[o * n_in] + b[o]
            for i in range(1, n_in):
                acc = acc + rows_in[i] * w[o * n_in + i]
            outs.append(jnp.maximum(acc, 0.0) if relu else acc)
        return outs

    tb = o_ref.shape[0]              # sublane rows in this block (static)
    n_strips = tb // _STRIP

    @pl.loop(0, n_strips)
    def _(s):
        r0 = pl.multiple_of(s * _STRIP, _STRIP)
        # Each feature row is a (STRIP, 128) slab of fully dense vregs.
        x_rows = [x_ref[i, pl.ds(r0, _STRIP), :] for i in range(_IN)]
        h1 = dense(x_rows, w1, b1, _H1, _IN, relu=True)    # relu(fc1)
        h2 = dense(h1, w2, b2, _H2, _H1, relu=True)        # relu(fc2)
        (y,) = dense(h2, w3, b3, _OUT, _H2, relu=False)    # fc3
        o_ref[pl.ds(r0, _STRIP), :] = y                    # lane-dense, unmasked vst


def _round_up(n, m):
    return ((n + m - 1) // m) * m


def _cdiv(a, b):
    return -(-a // b)


def net_forward(x, params, *, batch_tile=65536):
    """x: (B, 9) float32. params: dict of (out, in) weights / (out,) biases.

    Returns (B, 1) float32 == fc3(relu(fc2(relu(fc1(x))))).
    """
    B, f_in = x.shape
    assert f_in == _IN, f_in
    assert B >= 1

    # Pick a tile (rows per grid step) that is a multiple of the 2048-row
    # quantum and keeps padding waste bounded for any B.
    g_steps = max(1, _cdiv(B, max(batch_tile, 1)))
    tile = _round_up(_cdiv(B, g_steps), _QUANTUM)
    b_pad = g_steps * tile
    tb = tile // _LANES          # sublane rows per grid step (multiple of _STRIP)
    rows = b_pad // _LANES       # total sublane rows

    # Batch-on-lanes layout: (B, 9) -> zero-pad -> (9, b_pad) -> (9, rows, 128).
    x_t = jnp.pad(x.astype(jnp.float32).T, ((0, 0), (0, b_pad - B)))
    x3 = x_t.reshape(_IN, rows, _LANES)

    # Flatten tiny params for scalar SMEM reads (PyTorch (out, in) row-major).
    w1 = params["w1"].reshape(-1).astype(jnp.float32)   # (27,)
    b1 = params["b1"].reshape(-1).astype(jnp.float32)   # (3,)
    w2 = params["w2"].reshape(-1).astype(jnp.float32)   # (9,)
    b2 = params["b2"].reshape(-1).astype(jnp.float32)   # (3,)
    w3 = params["w3"].reshape(-1).astype(jnp.float32)   # (3,)
    b3 = params["b3"].reshape(-1).astype(jnp.float32)   # (1,)

    smem = pl.BlockSpec(memory_space=pltpu.MemorySpace.SMEM)
    out3 = pl.pallas_call(
        _mlp_kernel,
        out_shape=jax.ShapeDtypeStruct((rows, _LANES), jnp.float32),
        grid=(g_steps,),
        in_specs=[
            pl.BlockSpec((_IN, tb, _LANES), lambda g: (0, g, 0)),
            smem, smem, smem, smem, smem, smem,
        ],
        out_specs=pl.BlockSpec((tb, _LANES), lambda g: (g, 0)),
        compiler_params=pltpu.CompilerParams(
            dimension_semantics=("parallel",),   # v7x megacore sharding of the batch
        ),
    )(x3, w1, b1, w2, b2, w3, b3)

    return out3.reshape(b_pad)[:B].reshape(B, 1)


def init_params(key):
    """nn.Linear default init: U(-1/sqrt(fan_in), +1/sqrt(fan_in)), (out, in) weights."""
    def linear(k, fan_in, fan_out):
        kw, kb = jax.random.split(k)
        bound = 1.0 / math.sqrt(fan_in)
        w = jax.random.uniform(kw, (fan_out, fan_in), jnp.float32, -bound, bound)
        b = jax.random.uniform(kb, (fan_out,), jnp.float32, -bound, bound)
        return w, b

    k1, k2, k3 = jax.random.split(key, 3)
    w1, b1 = linear(k1, _IN, _H1)
    w2, b2 = linear(k2, _H1, _H2)
    w3, b3 = linear(k3, _H2, _OUT)
    return {"w1": w1, "b1": b1, "w2": w2, "b2": b2, "w3": w3, "b3": b3}


def net_forward_ref(x, p):
    """Pure-JAX reference (matches the PyTorch forward)."""
    h1 = jnp.maximum(x @ p["w1"].T + p["b1"], 0.0)
    h2 = jnp.maximum(h1 @ p["w2"].T + p["b2"], 0.0)
    return h2 @ p["w3"].T + p["b3"]


if __name__ == "__main__":
    key = jax.random.PRNGKey(0)
    kx, kx2, kp = jax.random.split(key, 3)
    params = init_params(kp)

    # Small demo batch of 9-dim state features.
    B = 8
    x = jax.random.normal(kx, (B, _IN), dtype=jnp.float32)
    out = jax.block_until_ready(net_forward(x, params))
    ref = net_forward_ref(x, params)
    assert out.shape == (B, 1), out.shape
    assert jnp.allclose(out, ref, atol=1e-5, rtol=1e-5), (out, ref)

    # Multi-tile batch with a ragged tail: exercises the grid + padding path.
    B2 = 2500
    x2 = jax.random.normal(kx2, (B2, _IN), dtype=jnp.float32)
    out2 = jax.block_until_ready(net_forward(x2, params, batch_tile=2048))
    ref2 = net_forward_ref(x2, params)
    assert out2.shape == (B2, 1), out2.shape
    assert jnp.allclose(out2, ref2, atol=1e-5, rtol=1e-5)

    print("KERNEL_OK")
</pallas_src>

<mosaic_0001>
module attributes {stable_mosaic.version = 11 : i64} {
  func.func @_mlp_kernel(%arg0: i32, %arg1: memref<9x16x128xf32, #tpu.memory_space<vmem>>, %arg2: memref<27xf32, #tpu.memory_space<smem>>, %arg3: memref<3xf32, #tpu.memory_space<smem>>, %arg4: memref<9xf32, #tpu.memory_space<smem>>, %arg5: memref<3xf32, #tpu.memory_space<smem>>, %arg6: memref<3xf32, #tpu.memory_space<smem>>, %arg7: memref<1xf32, #tpu.memory_space<smem>>, %arg8: memref<16x128xf32, #tpu.memory_space<vmem>>) attributes {dimension_semantics = [#tpu.dimension_semantics<parallel>], iteration_bounds = array<i64: 1>, scalar_prefetch = 0 : i64, scratch_operands = 0 : i64, tpu.core_type = #tpu.core_type<tc>, window_params = [{transform_indices = @transform_0, window_bounds = array<i64: 9, 16, 128>}, {transform_indices = @transform_1, window_bounds = array<i64: 27>}, {transform_indices = @transform_2, window_bounds = array<i64: 3>}, {transform_indices = @transform_3, window_bounds = array<i64: 9>}, {transform_indices = @transform_4, window_bounds = array<i64: 3>}, {transform_indices = @transform_5, window_bounds = array<i64: 3>}, {transform_indices = @transform_6, window_bounds = array<i64: 1>}, {transform_indices = @transform_7, window_bounds = array<i64: 16, 128>}]} {
    %c0 = arith.constant 0 : index
    %0 = memref.load %arg2[%c0] : memref<27xf32, #tpu.memory_space<smem>>
    %c1 = arith.constant 1 : index
    %1 = memref.load %arg2[%c1] : memref<27xf32, #tpu.memory_space<smem>>
    %c2 = arith.constant 2 : index
    %2 = memref.load %arg2[%c2] : memref<27xf32, #tpu.memory_space<smem>>
    %c3 = arith.constant 3 : index
    %3 = memref.load %arg2[%c3] : memref<27xf32, #tpu.memory_space<smem>>
    %c4 = arith.constant 4 : index
    %4 = memref.load %arg2[%c4] : memref<27xf32, #tpu.memory_space<smem>>
    %c5 = arith.constant 5 : index
    %5 = memref.load %arg2[%c5] : memref<27xf32, #tpu.memory_space<smem>>
    %c6 = arith.constant 6 : index
    %6 = memref.load %arg2[%c6] : memref<27xf32, #tpu.memory_space<smem>>
    %c7 = arith.constant 7 : index
    %7 = memref.load %arg2[%c7] : memref<27xf32, #tpu.memory_space<smem>>
    %c8 = arith.constant 8 : index
    %8 = memref.load %arg2[%c8] : memref<27xf32, #tpu.memory_space<smem>>
    %c9 = arith.constant 9 : index
    %9 = memref.load %arg2[%c9] : memref<27xf32, #tpu.memory_space<smem>>
    %c10 = arith.constant 10 : index
    %10 = memref.load %arg2[%c10] : memref<27xf32, #tpu.memory_space<smem>>
    %c11 = arith.constant 11 : index
    %11 = memref.load %arg2[%c11] : memref<27xf32, #tpu.memory_space<smem>>
    %c12 = arith.constant 12 : index
    %12 = memref.load %arg2[%c12] : memref<27xf32, #tpu.memory_space<smem>>
    %c13 = arith.constant 13 : index
    %13 = memref.load %arg2[%c13] : memref<27xf32, #tpu.memory_space<smem>>
    %c14 = arith.constant 14 : index
    %14 = memref.load %arg2[%c14] : memref<27xf32, #tpu.memory_space<smem>>
    %c15 = arith.constant 15 : index
    %15 = memref.load %arg2[%c15] : memref<27xf32, #tpu.memory_space<smem>>
    %c16 = arith.constant 16 : index
    %16 = memref.load %arg2[%c16] : memref<27xf32, #tpu.memory_space<smem>>
    %c17 = arith.constant 17 : index
    %17 = memref.load %arg2[%c17] : memref<27xf32, #tpu.memory_space<smem>>
    %c18 = arith.constant 18 : index
    %18 = memref.load %arg2[%c18] : memref<27xf32, #tpu.memory_space<smem>>
    %c19 = arith.constant 19 : index
    %19 = memref.load %arg2[%c19] : memref<27xf32, #tpu.memory_space<smem>>
    %c20 = arith.constant 20 : index
    %20 = memref.load %arg2[%c20] : memref<27xf32, #tpu.memory_space<smem>>
    %c21 = arith.constant 21 : index
    %21 = memref.load %arg2[%c21] : memref<27xf32, #tpu.memory_space<smem>>
    %c22 = arith.constant 22 : index
    %22 = memref.load %arg2[%c22] : memref<27xf32, #tpu.memory_space<smem>>
    %c23 = arith.constant 23 : index
    %23 = memref.load %arg2[%c23] : memref<27xf32, #tpu.memory_space<smem>>
    %c24 = arith.constant 24 : index
    %24 = memref.load %arg2[%c24] : memref<27xf32, #tpu.memory_space<smem>>
    %c25 = arith.constant 25 : index
    %25 = memref.load %arg2[%c25] : memref<27xf32, #tpu.memory_space<smem>>
    %c26 = arith.constant 26 : index
    %26 = memref.load %arg2[%c26] : memref<27xf32, #tpu.memory_space<smem>>
    %c0_0 = arith.constant 0 : index
    %27 = memref.load %arg3[%c0_0] : memref<3xf32, #tpu.memory_space<smem>>
    %c1_1 = arith.constant 1 : index
    %28 = memref.load %arg3[%c1_1] : memref<3xf32, #tpu.memory_space<smem>>
    %c2_2 = arith.constant 2 : index
    %29 = memref.load %arg3[%c2_2] : memref<3xf32, #tpu.memory_space<smem>>
    %c0_3 = arith.constant 0 : index
    %30 = memref.load %arg4[%c0_3] : memref<9xf32, #tpu.memory_space<smem>>
    %c1_4 = arith.constant 1 : index
    %31 = memref.load %arg4[%c1_4] : memref<9xf32, #tpu.memory_space<smem>>
    %c2_5 = arith.constant 2 : index
    %32 = memref.load %arg4[%c2_5] : memref<9xf32, #tpu.memory_space<smem>>
    %c3_6 = arith.constant 3 : index
    %33 = memref.load %arg4[%c3_6] : memref<9xf32, #tpu.memory_space<smem>>
    %c4_7 = arith.constant 4 : index
    %34 = memref.load %arg4[%c4_7] : memref<9xf32, #tpu.memory_space<smem>>
    %c5_8 = arith.constant 5 : index
    %35 = memref.load %arg4[%c5_8] : memref<9xf32, #tpu.memory_space<smem>>
    %c6_9 = arith.constant 6 : index
    %36 = memref.load %arg4[%c6_9] : memref<9xf32, #tpu.memory_space<smem>>
    %c7_10 = arith.constant 7 : index
    %37 = memref.load %arg4[%c7_10] : memref<9xf32, #tpu.memory_space<smem>>
    %c8_11 = arith.constant 8 : index
    %38 = memref.load %arg4[%c8_11] : memref<9xf32, #tpu.memory_space<smem>>
    %c0_12 = arith.constant 0 : index
    %39 = memref.load %arg5[%c0_12] : memref<3xf32, #tpu.memory_space<smem>>
    %c1_13 = arith.constant 1 : index
    %40 = memref.load %arg5[%c1_13] : memref<3xf32, #tpu.memory_space<smem>>
    %c2_14 = arith.constant 2 : index
    %41 = memref.load %arg5[%c2_14] : memref<3xf32, #tpu.memory_space<smem>>
    %c0_15 = arith.constant 0 : index
    %42 = memref.load %arg6[%c0_15] : memref<3xf32, #tpu.memory_space<smem>>
    %c1_16 = arith.constant 1 : index
    %43 = memref.load %arg6[%c1_16] : memref<3xf32, #tpu.memory_space<smem>>
    %c2_17 = arith.constant 2 : index
    %44 = memref.load %arg6[%c2_17] : memref<3xf32, #tpu.memory_space<smem>>
    %c0_18 = arith.constant 0 : index
    %45 = memref.load %arg7[%c0_18] : memref<1xf32, #tpu.memory_space<smem>>
    %c0_i32 = arith.constant 0 : i32
    %c1_i32 = arith.constant 1 : i32
    %46 = arith.muli %c0_i32, %c1_i32 : i32
    %c0_i32_19 = arith.constant 0 : i32
    %47 = arith.addi %c0_i32_19, %46 : i32
    %c16_i32 = arith.constant 16 : i32
    %48 = arith.muli %47, %c16_i32 : i32
    %49 = tpu.assume_multiple %48, 16 : i32
    %c0_20 = arith.constant 0 : index
    %50 = arith.index_cast %49 : i32 to index
    %c0_21 = arith.constant 0 : index
    %51 = vector.load %arg1[%c0_20, %50, %c0_21] : memref<9x16x128xf32, #tpu.memory_space<vmem>>, vector<1x16x128xf32>
    %52 = vector.shape_cast %51 : vector<1x16x128xf32> to vector<16x128xf32>
    %c1_22 = arith.constant 1 : index
    %53 = arith.index_cast %49 : i32 to index
    %c0_23 = arith.constant 0 : index
    %54 = vector.load %arg1[%c1_22, %53, %c0_23] : memref<9x16x128xf32, #tpu.memory_space<vmem>>, vector<1x16x128xf32>
    %55 = vector.shape_cast %54 : vector<1x16x128xf32> to vector<16x128xf32>
    %c2_24 = arith.constant 2 : index
    %56 = arith.index_cast %49 : i32 to index
    %c0_25 = arith.constant 0 : index
    %57 = vector.load %arg1[%c2_24, %56, %c0_25] : memref<9x16x128xf32, #tpu.memory_space<vmem>>, vector<1x16x128xf32>
    %58 = vector.shape_cast %57 : vector<1x16x128xf32> to vector<16x128xf32>
    %c3_26 = arith.constant 3 : index
    %59 = arith.index_cast %49 : i32 to index
    %c0_27 = arith.constant 0 : index
    %60 = vector.load %arg1[%c3_26, %59, %c0_27] : memref<9x16x128xf32, #tpu.memory_space<vmem>>, vector<1x16x128xf32>
    %61 = vector.shape_cast %60 : vector<1x16x128xf32> to vector<16x128xf32>
    %c4_28 = arith.constant 4 : index
    %62 = arith.index_cast %49 : i32 to index
    %c0_29 = arith.constant 0 : index
    %63 = vector.load %arg1[%c4_28, %62, %c0_29] : memref<9x16x128xf32, #tpu.memory_space<vmem>>, vector<1x16x128xf32>
    %64 = vector.shape_cast %63 : vector<1x16x128xf32> to vector<16x128xf32>
    %c5_30 = arith.constant 5 : index
    %65 = arith.index_cast %49 : i32 to index
    %c0_31 = arith.constant 0 : index
    %66 = vector.load %arg1[%c5_30, %65, %c0_31] : memref<9x16x128xf32, #tpu.memory_space<vmem>>, vector<1x16x128xf32>
    %67 = vector.shape_cast %66 : vector<1x16x128xf32> to vector<16x128xf32>
    %c6_32 = arith.constant 6 : index
    %68 = arith.index_cast %49 : i32 to index
    %c0_33 = arith.constant 0 : index
    %69 = vector.load %arg1[%c6_32, %68, %c0_33] : memref<9x16x128xf32, #tpu.memory_space<vmem>>, vector<1x16x128xf32>
    %70 = vector.shape_cast %69 : vector<1x16x128xf32> to vector<16x128xf32>
    %c7_34 = arith.constant 7 : index
    %71 = arith.index_cast %49 : i32 to index
    %c0_35 = arith.constant 0 : index
    %72 = vector.load %arg1[%c7_34, %71, %c0_35] : memref<9x16x128xf32, #tpu.memory_space<vmem>>, vector<1x16x128xf32>
    %73 = vector.shape_cast %72 : vector<1x16x128xf32> to vector<16x128xf32>
    %c8_36 = arith.constant 8 : index
    %74 = arith.index_cast %49 : i32 to index
    %c0_37 = arith.constant 0 : index
    %75 = vector.load %arg1[%c8_36, %74, %c0_37] : memref<9x16x128xf32, #tpu.memory_space<vmem>>, vector<1x16x128xf32>
    %76 = vector.shape_cast %75 : vector<1x16x128xf32> to vector<16x128xf32>
    %77 = vector.broadcast %0 : f32 to vector<16x128xf32>
    %78 = arith.mulf %52, %77 : vector<16x128xf32>
    %79 = vector.broadcast %27 : f32 to vector<16x128xf32>
    %80 = arith.addf %78, %79 : vector<16x128xf32>
    %81 = vector.broadcast %1 : f32 to vector<16x128xf32>
    %82 = arith.mulf %55, %81 : vector<16x128xf32>
    %83 = arith.addf %80, %82 : vector<16x128xf32>
    %84 = vector.broadcast %2 : f32 to vector<16x128xf32>
    %85 = arith.mulf %58, %84 : vector<16x128xf32>
    %86 = arith.addf %83, %85 : vector<16x128xf32>
    %87 = vector.broadcast %3 : f32 to vector<16x128xf32>
    %88 = arith.mulf %61, %87 : vector<16x128xf32>
    %89 = arith.addf %86, %88 : vector<16x128xf32>
    %90 = vector.broadcast %4 : f32 to vector<16x128xf32>
    %91 = arith.mulf %64, %90 : vector<16x128xf32>
    %92 = arith.addf %89, %91 : vector<16x128xf32>
    %93 = vector.broadcast %5 : f32 to vector<16x128xf32>
    %94 = arith.mulf %67, %93 : vector<16x128xf32>
    %95 = arith.addf %92, %94 : vector<16x128xf32>
    %96 = vector.broadcast %6 : f32 to vector<16x128xf32>
    %97 = arith.mulf %70, %96 : vector<16x128xf32>
    %98 = arith.addf %95, %97 : vector<16x128xf32>
    %99 = vector.broadcast %7 : f32 to vector<16x128xf32>
    %100 = arith.mulf %73, %99 : vector<16x128xf32>
    %101 = arith.addf %98, %100 : vector<16x128xf32>
    %102 = vector.broadcast %8 : f32 to vector<16x128xf32>
    %103 = arith.mulf %76, %102 : vector<16x128xf32>
    %104 = arith.addf %101, %103 : vector<16x128xf32>
    %cst = arith.constant 0.000000e+00 : f32
    %105 = vector.broadcast %cst : f32 to vector<16x128xf32>
    %106 = arith.maximumf %104, %105 : vector<16x128xf32>
    %107 = vector.broadcast %9 : f32 to vector<16x128xf32>
    %108 = arith.mulf %52, %107 : vector<16x128xf32>
    %109 = vector.broadcast %28 : f32 to vector<16x128xf32>
    %110 = arith.addf %108, %109 : vector<16x128xf32>
    %111 = vector.broadcast %10 : f32 to vector<16x128xf32>
    %112 = arith.mulf %55, %111 : vector<16x128xf32>
    %113 = arith.addf %110, %112 : vector<16x128xf32>
    %114 = vector.broadcast %11 : f32 to vector<16x128xf32>
    %115 = arith.mulf %58, %114 : vector<16x128xf32>
    %116 = arith.addf %113, %115 : vector<16x128xf32>
    %117 = vector.broadcast %12 : f32 to vector<16x128xf32>
    %118 = arith.mulf %61, %117 : vector<16x128xf32>
    %119 = arith.addf %116, %118 : vector<16x128xf32>
    %120 = vector.broadcast %13 : f32 to vector<16x128xf32>
    %121 = arith.mulf %64, %120 : vector<16x128xf32>
    %122 = arith.addf %119, %121 : vector<16x128xf32>
    %123 = vector.broadcast %14 : f32 to vector<16x128xf32>
    %124 = arith.mulf %67, %123 : vector<16x128xf32>
    %125 = arith.addf %122, %124 : vector<16x128xf32>
    %126 = vector.broadcast %15 : f32 to vector<16x128xf32>
    %127 = arith.mulf %70, %126 : vector<16x128xf32>
    %128 = arith.addf %125, %127 : vector<16x128xf32>
    %129 = vector.broadcast %16 : f32 to vector<16x128xf32>
    %130 = arith.mulf %73, %129 : vector<16x128xf32>
    %131 = arith.addf %128, %130 : vector<16x128xf32>
    %132 = vector.broadcast %17 : f32 to vector<16x128xf32>
    %133 = arith.mulf %76, %132 : vector<16x128xf32>
    %134 = arith.addf %131, %133 : vector<16x128xf32>
    %cst_38 = arith.constant 0.000000e+00 : f32
    %135 = vector.broadcast %cst_38 : f32 to vector<16x128xf32>
    %136 = arith.maximumf %134, %135 : vector<16x128xf32>
    %137 = vector.broadcast %18 : f32 to vector<16x128xf32>
    %138 = arith.mulf %52, %137 : vector<16x128xf32>
    %139 = vector.broadcast %29 : f32 to vector<16x128xf32>
    %140 = arith.addf %138, %139 : vector<16x128xf32>
    %141 = vector.broadcast %19 : f32 to vector<16x128xf32>
    %142 = arith.mulf %55, %141 : vector<16x128xf32>
    %143 = arith.addf %140, %142 : vector<16x128xf32>
    %144 = vector.broadcast %20 : f32 to vector<16x128xf32>
    %145 = arith.mulf %58, %144 : vector<16x128xf32>
    %146 = arith.addf %143, %145 : vector<16x128xf32>
    %147 = vector.broadcast %21 : f32 to vector<16x128xf32>
    %148 = arith.mulf %61, %147 : vector<16x128xf32>
    %149 = arith.addf %146, %148 : vector<16x128xf32>
    %150 = vector.broadcast %22 : f32 to vector<16x128xf32>
    %151 = arith.mulf %64, %150 : vector<16x128xf32>
    %152 = arith.addf %149, %151 : vector<16x128xf32>
    %153 = vector.broadcast %23 : f32 to vector<16x128xf32>
    %154 = arith.mulf %67, %153 : vector<16x128xf32>
    %155 = arith.addf %152, %154 : vector<16x128xf32>
    %156 = vector.broadcast %24 : f32 to vector<16x128xf32>
    %157 = arith.mulf %70, %156 : vector<16x128xf32>
    %158 = arith.addf %155, %157 : vector<16x128xf32>
    %159 = vector.broadcast %25 : f32 to vector<16x128xf32>
    %160 = arith.mulf %73, %159 : vector<16x128xf32>
    %161 = arith.addf %158, %160 : vector<16x128xf32>
    %162 = vector.broadcast %26 : f32 to vector<16x128xf32>
    %163 = arith.mulf %76, %162 : vector<16x128xf32>
    %164 = arith.addf %161, %163 : vector<16x128xf32>
    %cst_39 = arith.constant 0.000000e+00 : f32
    %165 = vector.broadcast %cst_39 : f32 to vector<16x128xf32>
    %166 = arith.maximumf %164, %165 : vector<16x128xf32>
    %167 = vector.broadcast %30 : f32 to vector<16x128xf32>
    %168 = arith.mulf %106, %167 : vector<16x128xf32>
    %169 = vector.broadcast %39 : f32 to vector<16x128xf32>
    %170 = arith.addf %168, %169 : vector<16x128xf32>
    %171 = vector.broadcast %31 : f32 to vector<16x128xf32>
    %172 = arith.mulf %136, %171 : vector<16x128xf32>
    %173 = arith.addf %170, %172 : vector<16x128xf32>
    %174 = vector.broadcast %32 : f32 to vector<16x128xf32>
    %175 = arith.mulf %166, %174 : vector<16x128xf32>
    %176 = arith.addf %173, %175 : vector<16x128xf32>
    %cst_40 = arith.constant 0.000000e+00 : f32
    %177 = vector.broadcast %cst_40 : f32 to vector<16x128xf32>
    %178 = arith.maximumf %176, %177 : vector<16x128xf32>
    %179 = vector.broadcast %33 : f32 to vector<16x128xf32>
    %180 = arith.mulf %106, %179 : vector<16x128xf32>
    %181 = vector.broadcast %40 : f32 to vector<16x128xf32>
    %182 = arith.addf %180, %181 : vector<16x128xf32>
    %183 = vector.broadcast %34 : f32 to vector<16x128xf32>
    %184 = arith.mulf %136, %183 : vector<16x128xf32>
    %185 = arith.addf %182, %184 : vector<16x128xf32>
    %186 = vector.broadcast %35 : f32 to vector<16x128xf32>
    %187 = arith.mulf %166, %186 : vector<16x128xf32>
    %188 = arith.addf %185, %187 : vector<16x128xf32>
    %cst_41 = arith.constant 0.000000e+00 : f32
    %189 = vector.broadcast %cst_41 : f32 to vector<16x128xf32>
    %190 = arith.maximumf %188, %189 : vector<16x128xf32>
    %191 = vector.broadcast %36 : f32 to vector<16x128xf32>
    %192 = arith.mulf %106, %191 : vector<16x128xf32>
    %193 = vector.broadcast %41 : f32 to vector<16x128xf32>
    %194 = arith.addf %192, %193 : vector<16x128xf32>
    %195 = vector.broadcast %37 : f32 to vector<16x128xf32>
    %196 = arith.mulf %136, %195 : vector<16x128xf32>
    %197 = arith.addf %194, %196 : vector<16x128xf32>
    %198 = vector.broadcast %38 : f32 to vector<16x128xf32>
    %199 = arith.mulf %166, %198 : vector<16x128xf32>
    %200 = arith.addf %197, %199 : vector<16x128xf32>
    %cst_42 = arith.constant 0.000000e+00 : f32
    %201 = vector.broadcast %cst_42 : f32 to vector<16x128xf32>
    %202 = arith.maximumf %200, %201 : vector<16x128xf32>
    %203 = vector.broadcast %42 : f32 to vector<16x128xf32>
    %204 = arith.mulf %178, %203 : vector<16x128xf32>
    %205 = vector.broadcast %45 : f32 to vector<16x128xf32>
    %206 = arith.addf %204, %205 : vector<16x128xf32>
    %207 = vector.broadcast %43 : f32 to vector<16x128xf32>
    %208 = arith.mulf %190, %207 : vector<16x128xf32>
    %209 = arith.addf %206, %208 : vector<16x128xf32>
    %210 = vector.broadcast %44 : f32 to vector<16x128xf32>
    %211 = arith.mulf %202, %210 : vector<16x128xf32>
    %212 = arith.addf %209, %211 : vector<16x128xf32>
    %213 = arith.index_cast %49 : i32 to index
    %c0_43 = arith.constant 0 : index
    %214 = vector.load %arg8[%213, %c0_43] : memref<16x128xf32, #tpu.memory_space<vmem>>, vector<16x128xf32>
    tpu.vector_store %arg8[%213, %c0_43], %212 {strides = array<i32>} : memref<16x128xf32, #tpu.memory_space<vmem>>, vector<16x128xf32>,
    %c1_i32_44 = arith.constant 1 : i32
    return
  }
  func.func @transform_0(%arg0: i32) -> (i32, i32, i32) {
    %c0_i32 = arith.constant 0 : i32
    %c0_i32_0 = arith.constant 0 : i32
    %c0_i32_1 = arith.constant 0 : i32
    return %c0_i32, %arg0, %c0_i32_0 : i32, i32, i32
  }
  func.func @transform_1(%arg0: i32) -> i32 {
    %c0_i32 = arith.constant 0 : i32
    %c0_i32_0 = arith.constant 0 : i32
    return %c0_i32 : i32
  }
  func.func @transform_2(%arg0: i32) -> i32 {
    %c0_i32 = arith.constant 0 : i32
    %c0_i32_0 = arith.constant 0 : i32
    return %c0_i32 : i32
  }
  func.func @transform_3(%arg0: i32) -> i32 {
    %c0_i32 = arith.constant 0 : i32
    %c0_i32_0 = arith.constant 0 : i32
    return %c0_i32 : i32
  }
  func.func @transform_4(%arg0: i32) -> i32 {
    %c0_i32 = arith.constant 0 : i32
    %c0_i32_0 = arith.constant 0 : i32
    return %c0_i32 : i32
  }
  func.func @transform_5(%arg0: i32) -> i32 {
    %c0_i32 = arith.constant 0 : i32
    %c0_i32_0 = arith.constant 0 : i32
    return %c0_i32 : i32
  }
  func.func @transform_6(%arg0: i32) -> i32 {
    %c0_i32 = arith.constant 0 : i32
    %c0_i32_0 = arith.constant 0 : i32
    return %c0_i32 : i32
  }
  func.func @transform_7(%arg0: i32) -> (i32, i32) {
    %c0_i32 = arith.constant 0 : i32
    %c0_i32_0 = arith.constant 0 : i32
    return %arg0, %c0_i32 : i32, i32
  }
}

</mosaic_0001>

<llo_original>
// kernel: tpu_custom_call.1
$region0: #{tpu_custom_call.1}
  #allocation0 [shape = 'u32[]', space=smem, size = 0x4, offset = 0x4, fixed_abs, tag = 'smem constant byte address 0x4 - core index']
  #allocation1 [shape = 'u32[72,128]{1,0:T(1,128)}', space=vmem, size = 0x9000, scoped, tag = 'internal scratch']
  #allocation2 [shape = 'f32[1]{0:T(128)S(6)}', space=smem, size = 0x200, scoped, tag = 'scoped memory for tpu_custom_call.1']
  %s0 = inlined_call_operand.hbm [shape: f32[9,16,128], index: 0, kind: input, shape index: {}]
  %s1 = inlined_call_operand.vmem [shape: f32[27], index: 1, kind: input, shape index: {}]
  %s2 = inlined_call_operand.vmem [shape: f32[3], index: 2, kind: input, shape index: {}]
  %s3 = inlined_call_operand.vmem [shape: f32[9], index: 3, kind: input, shape index: {}]
  %s4 = inlined_call_operand.vmem [shape: f32[3], index: 4, kind: input, shape index: {}]
  %s5 = inlined_call_operand.vmem [shape: f32[3], index: 5, kind: input, shape index: {}]
  %s6 = inlined_call_operand.<no memory space> [shape: f32[1], index: 6, kind: input, shape index: {}]
  %s7 = inlined_call_operand.hbm [shape: f32[16,128], index: 7, kind: output, shape index: {}]
  %s8 = sld [smem:[#allocation0]]
  $region62: #{tpu_custom_call.1} parent=0
    _
  %s10 = ssub.s32 1, %s8
  %s11 = scalar_select 0, %s10, %s8
  %12 = sst [smem:[#allocation2]] %s6
  $region1: #{tpu_custom_call.1} parent=0
    #allocation3 [shape = 'u8[73728]{0}', space=vmem, size = 0x12000, scoped, tag = 'input window, operand 0, single buffered']
    #allocation4 [shape = 's32[1]{0}', space=sflag, size = 0x4, scoped, tag = 'scoped memory for tpu_custom_call.1']
    #allocation5 [shape = 's32[1]{0}', space=sflag, size = 0x4, scoped, tag = 'scoped memory for tpu_custom_call.1']
    #allocation6 [shape = 's32[1]{0}', space=sflag, size = 0x4, scoped, tag = 'scoped memory for tpu_custom_call.1']
    #allocation7 [shape = 'u8[512]{0}', space=smem, size = 0x200, scoped, tag = 'input window, operand 1, single buffered']
    #allocation8 [shape = 'u8[512]{0}', space=smem, size = 0x200, scoped, tag = 'input window, operand 2, single buffered']
    #allocation9 [shape = 's32[1]{0}', space=sflag, size = 0x4, scoped, tag = 'scoped memory for tpu_custom_call.1']
    #allocation10 [shape = 'u8[512]{0}', space=smem, size = 0x200, scoped, tag = 'input window, operand 3, single buffered']
    #allocation11 [shape = 'u8[512]{0}', space=smem, size = 0x200, scoped, tag = 'input window, operand 4, single buffered']
    #allocation12 [shape = 's32[1]{0}', space=sflag, size = 0x4, scoped, tag = 'scoped memory for tpu_custom_call.1']
    #allocation13 [shape = 'u8[512]{0}', space=smem, size = 0x200, scoped, tag = 'input window, operand 5, single buffered']
    #allocation14 [shape = 'u8[8192]{0}', space=vmem, size = 0x2000, scoped, tag = 'output window, operand 0, single buffered']
    %13 = vsyncpa [#allocation4], 0
    %14 = vsyncpa [#allocation6], 0
    %15 = vsyncpa [#allocation9], 0
    %16 = vsyncpa [#allocation12], 0
    %17 = vsyncpa [#allocation5], 0
    // Predicated region
    $region2: #{tpu_custom_call.1} parent=1 // pred_check
      _
    $region3: #{tpu_custom_call.1} parent=1 // pred_check_branch
      %19 = sbr.rel (0) target = $region5
    $region4: #{tpu_custom_call.1} parent=1 // pred_region
      %21 = vsyncadd [#allocation4], 0
      %s22 = sshll.u32 %s0, 4
      %s23 = int_to_ptr.hbm [resolvable:$true] %s22
      %s24 = sshll.u32 [#allocation3], 4
      %s25 = int_to_ptr.vmem [resolvable:$true] %s24
      %30 = dma.hbm_to_vmem [thread:$0]  %s23, 2304, %s25, [#allocation4], 128, 128, 8
    $region5: #{tpu_custom_call.1} parent=1 // pred_fallthru
      _
    // Predicated region
    $region6: #{tpu_custom_call.1} parent=1 // pred_check
      _
    $region7: #{tpu_custom_call.1} parent=1 // pred_check_branch
      %32 = sbr.rel (0) target = $region9
    $region8: #{tpu_custom_call.1} parent=1 // pred_region
      %34 = vsyncadd [#allocation6], 0
      %s36 = sshll.u32 %s1, 4
      %s37 = int_to_ptr.vmem [resolvable:$true] %s36
      %39 = dma.vmem_to_smem %s37, 16, [#allocation7], [#allocation6]
    $region9: #{tpu_custom_call.1} parent=1 // pred_fallthru
      _
    // Predicated region
    $region10: #{tpu_custom_call.1} parent=1 // pred_check
      _
    $region11: #{tpu_custom_call.1} parent=1 // pred_check_branch
      %41 = sbr.rel (0) target = $region13
    $region12: #{tpu_custom_call.1} parent=1 // pred_region
      %43 = vsyncadd [#allocation9], 0
      %s45 = sshll.u32 %s2, 4
      %s46 = int_to_ptr.vmem [resolvable:$true] %s45
      %48 = dma.vmem_to_smem %s46, 16, [#allocation8], [#allocation9]
    $region13: #{tpu_custom_call.1} parent=1 // pred_fallthru
      _
    // Predicated region
    $region14: #{tpu_custom_call.1} parent=1 // pred_check
      _
    $region15: #{tpu_custom_call.1} parent=1 // pred_check_branch
      %50 = sbr.rel (0) target = $region17
    $region16: #{tpu_custom_call.1} parent=1 // pred_region
      %52 = vsyncadd [#allocation9], 0
      %s54 = sshll.u32 %s3, 4
      %s55 = int_to_ptr.vmem [resolvable:$true] %s54
      %57 = dma.vmem_to_smem %s55, 16, [#allocation10], [#allocation9]
    $region17: #{tpu_custom_call.1} parent=1 // pred_fallthru
      _
    // Predicated region
    $region18: #{tpu_custom_call.1} parent=1 // pred_check
      _
    $region19: #{tpu_custom_call.1} parent=1 // pred_check_branch
      %59 = sbr.rel (0) target = $region21
    $region20: #{tpu_custom_call.1} parent=1 // pred_region
      %61 = vsyncadd [#allocation12], 0
      %s63 = sshll.u32 %s4, 4
      %s64 = int_to_ptr.vmem [resolvable:$true] %s63
      %66 = dma.vmem_to_smem %s64, 16, [#allocation11], [#allocation12]
    $region21: #{tpu_custom_call.1} parent=1 // pred_fallthru
      _
    // Predicated region
    $region22: #{tpu_custom_call.1} parent=1 // pred_check
      _
    $region23: #{tpu_custom_call.1} parent=1 // pred_check_branch
      %68 = sbr.rel (0) target = $region25
    $region24: #{tpu_custom_call.1} parent=1 // pred_region
      %70 = vsyncadd [#allocation12], 0
      %s72 = sshll.u32 %s5, 4
      %s73 = int_to_ptr.vmem [resolvable:$true] %s72
      %75 = dma.vmem_to_smem %s73, 16, [#allocation13], [#allocation12]
    $region25: #{tpu_custom_call.1} parent=1 // pred_fallthru
      _
    // Predicated region
    $region26: #{tpu_custom_call.1} parent=1 // pred_check
      _
    $region27: #{tpu_custom_call.1} parent=1 // pred_check_branch
      %77 = sbr.rel (0) target = $region29
    $region28: #{tpu_custom_call.1} parent=1 // pred_region
      _
    $region29: #{tpu_custom_call.1} parent=1 // pred_fallthru
      _
    // Predicated region
    $region30: #{tpu_custom_call.1} parent=1 // pred_check
      _
    $region31: #{tpu_custom_call.1} parent=1 // pred_check_branch
      %79 = sbr.rel (0) target = $region33
    $region32: #{tpu_custom_call.1} parent=1 // pred_region
      %81 = dma.done [#allocation4], 2304
    $region33: #{tpu_custom_call.1} parent=1 // pred_fallthru
      _
    // Predicated region
    $region34: #{tpu_custom_call.1} parent=1 // pred_check
      _
    $region35: #{tpu_custom_call.1} parent=1 // pred_check_branch
      %83 = sbr.rel (0) target = $region37
    $region36: #{tpu_custom_call.1} parent=1 // pred_region
      %85 = dma.done [#allocation6], 16
    $region37: #{tpu_custom_call.1} parent=1 // pred_fallthru
      _
    // Predicated region
    $region38: #{tpu_custom_call.1} parent=1 // pred_check
      _
    $region39: #{tpu_custom_call.1} parent=1 // pred_check_branch
      %87 = sbr.rel (0) target = $region41
    $region40: #{tpu_custom_call.1} parent=1 // pred_region
      %89 = dma.done [#allocation9], 16
    $region41: #{tpu_custom_call.1} parent=1 // pred_fallthru
      _
    // Predicated region
    $region42: #{tpu_custom_call.1} parent=1 // pred_check
      _
    $region43: #{tpu_custom_call.1} parent=1 // pred_check_branch
      %91 = sbr.rel (0) target = $region45
    $region44: #{tpu_custom_call.1} parent=1 // pred_region
      %93 = dma.done [#allocation9], 16
    $region45: #{tpu_custom_call.1} parent=1 // pred_fallthru
      _
    // Predicated region
    $region46: #{tpu_custom_call.1} parent=1 // pred_check
      _
    $region47: #{tpu_custom_call.1} parent=1 // pred_check_branch
      %95 = sbr.rel (0) target = $region49
    $region48: #{tpu_custom_call.1} parent=1 // pred_region
      %97 = dma.done [#allocation12], 16
    $region49: #{tpu_custom_call.1} parent=1 // pred_fallthru
      _
    // Predicated region
    $region50: #{tpu_custom_call.1} parent=1 // pred_check
      _
    $region51: #{tpu_custom_call.1} parent=1 // pred_check_branch
      %99 = sbr.rel (0) target = $region53
    $region52: #{tpu_custom_call.1} parent=1 // pred_region
      %101 = dma.done [#allocation12], 16
    $region53: #{tpu_custom_call.1} parent=1 // pred_fallthru
      _
    %102 = sfence
    %s103 = sld [smem:[#allocation7]]
    %s104 = sld [smem:[#allocation7 + $0x1]]
    %s105 = sld [smem:[#allocation7 + $0x2]]
    %s106 = sld [smem:[#allocation7 + $0x3]]
    %s107 = sld [smem:[#allocation7 + $0x4]]
    %s108 = sld [smem:[#allocation7 + $0x5]]
    %s109 = sld [smem:[#allocation7 + $0x6]]
    %s110 = sld [smem:[#allocation7 + $0x7]]
    %s111 = sld [smem:[#allocation7 + $0x8]]
    %s112 = sld [smem:[#allocation7 + $0x9]]
    %s113 = sld [smem:[#allocation7 + $0xa]]
    %s114 = sld [smem:[#allocation7 + $0xb]]
    %s115 = sld [smem:[#allocation7 + $0xc]]
    %s116 = sld [smem:[#allocation7 + $0xd]]
    %s117 = sld [smem:[#allocation7 + $0xe]]
    %s118 = sld [smem:[#allocation7 + $0xf]]
    %s119 = sld [smem:[#allocation7 + $0x10]]
    %s120 = sld [smem:[#allocation7 + $0x11]]
    %s121 = sld [smem:[#allocation7 + $0x12]]
    %s122 = sld [smem:[#allocation7 + $0x13]]
    %s123 = sld [smem:[#allocation7 + $0x14]]
    %s124 = sld [smem:[#allocation7 + $0x15]]
    %s125 = sld [smem:[#allocation7 + $0x16]]
    %s126 = sld [smem:[#allocation7 + $0x17]]
    %s127 = sld [smem:[#allocation7 + $0x18]]
    %s128 = sld [smem:[#allocation7 + $0x19]]
    %s129 = sld [smem:[#allocation7 + $0x1a]]
    %s130 = sld [smem:[#allocation8]]
    %s131 = sld [smem:[#allocation8 + $0x1]]
    %s132 = sld [smem:[#allocation8 + $0x2]]
    %s133 = sld [smem:[#allocation10]]
    %s134 = sld [smem:[#allocation10 + $0x1]]
    %s135 = sld [smem:[#allocation10 + $0x2]]
    %s136 = sld [smem:[#allocation10 + $0x3]]
    %s137 = sld [smem:[#allocation10 + $0x4]]
    %s138 = sld [smem:[#allocation10 + $0x5]]
    %s139 = sld [smem:[#allocation10 + $0x6]]
    %s140 = sld [smem:[#allocation10 + $0x7]]
    %s141 = sld [smem:[#allocation10 + $0x8]]
    %s142 = sld [smem:[#allocation11]]
    %s143 = sld [smem:[#allocation11 + $0x1]]
    %s144 = sld [smem:[#allocation11 + $0x2]]
    %s145 = sld [smem:[#allocation13]]
    %s146 = sld [smem:[#allocation13 + $0x1]]
    %s147 = sld [smem:[#allocation13 + $0x2]]
    %s148 = sld [smem:[#allocation2]]
    %v149 = vld [vmem:[#allocation3] sm:$0xff]
    %v150 = vld [vmem:[#allocation3 + $0x8] sm:$0xff]
    %s151 = sadd.s32 0, 16
    %s152 = scalar_lea.vmem [#allocation3], %s151
    %v153 = vld [vmem:[%s152] sm:$0xff]
    %v154 = vld [vmem:[%s152 + $0x8] sm:$0xff]
    %s155 = sadd.s32 0, 32
    %s156 = scalar_lea.vmem [#allocation3], %s155
    %v157 = vld [vmem:[%s156] sm:$0xff]
    %v158 = vld [vmem:[%s156 + $0x8] sm:$0xff]
    %s159 = sadd.s32 0, 48
    %s160 = scalar_lea.vmem [#allocation3], %s159
    %v161 = vld [vmem:[%s160] sm:$0xff]
    %v162 = vld [vmem:[%s160 + $0x8] sm:$0xff]
    %s163 = sadd.s32 0, 64
    %s164 = scalar_lea.vmem [#allocation3], %s163
    %v165 = vld [vmem:[%s164] sm:$0xff]
    %v166 = vld [vmem:[%s164 + $0x8] sm:$0xff]
    %s167 = sadd.s32 0, 80
    %s168 = scalar_lea.vmem [#allocation3], %s167
    %v169 = vld [vmem:[%s168] sm:$0xff]
    %v170 = vld [vmem:[%s168 + $0x8] sm:$0xff]
    %s171 = sadd.s32 0, 96
    %s172 = scalar_lea.vmem [#allocation3], %s171
    %v173 = vld [vmem:[%s172] sm:$0xff]
    %v174 = vld [vmem:[%s172 + $0x8] sm:$0xff]
    %s175 = sadd.s32 0, 112
    %s176 = scalar_lea.vmem [#allocation3], %s175
    %v177 = vld [vmem:[%s176] sm:$0xff]
    %v178 = vld [vmem:[%s176 + $0x8] sm:$0xff]
    %s179 = sadd.s32 0, 128
    %s180 = scalar_lea.vmem [#allocation3], %s179
    %v181 = vld [vmem:[%s180] sm:$0xff]
    %v182 = vld [vmem:[%s180 + $0x8] sm:$0xff]
    %v183 = vstv %s103
    %v184 = vmul.f32 %v149, %v183
    %v185 = vmul.f32 %v150, %v183
    %v186 = vstv %s130
    %v187 = vadd.f32 %v184, %v186
    %v188 = vadd.f32 %v185, %v186
    %v189 = vstv %s104
    %v190 = vmul.f32 %v153, %v189
    %v191 = vmul.f32 %v154, %v189
    %v192 = vadd.f32 %v187, %v190
    %v193 = vadd.f32 %v188, %v191
    %v194 = vstv %s105
    %v195 = vmul.f32 %v157, %v194
    %v196 = vmul.f32 %v158, %v194
    %v197 = vadd.f32 %v192, %v195
    %v198 = vadd.f32 %v193, %v196
    %v199 = vstv %s106
    %v200 = vmul.f32 %v161, %v199
    %v201 = vmul.f32 %v162, %v199
    %v202 = vadd.f32 %v197, %v200
    %v203 = vadd.f32 %v198, %v201
    %v204 = vstv %s107
    %v205 = vmul.f32 %v165, %v204
    %v206 = vmul.f32 %v166, %v204
    %v207 = vadd.f32 %v202, %v205
    %v208 = vadd.f32 %v203, %v206
    %v209 = vstv %s108
    %v210 = vmul.f32 %v169, %v209
    %v211 = vmul.f32 %v170, %v209
    %v212 = vadd.f32 %v207, %v210
    %v213 = vadd.f32 %v208, %v211
    %v214 = vstv %s109
    %v215 = vmul.f32 %v173, %v214
    %v216 = vmul.f32 %v174, %v214
    %v217 = vadd.f32 %v212, %v215
    %v218 = vadd.f32 %v213, %v216
    %v219 = vstv %s110
    %v220 = vmul.f32 %v177, %v219
    %v221 = vmul.f32 %v178, %v219
    %v222 = vadd.f32 %v217, %v220
    %v223 = vadd.f32 %v218, %v221
    %v224 = vstv %s111
    %v225 = vmul.f32 %v181, %v224
    %v226 = vmul.f32 %v182, %v224
    %v227 = vadd.f32 %v222, %v225
    %v228 = vadd.f32 %v223, %v226
    %v229 = vmax.f32 %v227, 0.0
    %v230 = vmax.f32 %v228, 0.0
    %v231 = vstv %s112
    %v232 = vmul.f32 %v149, %v231
    %v233 = vmul.f32 %v150, %v231
    %v234 = vstv %s131
    %v235 = vadd.f32 %v232, %v234
    %v236 = vadd.f32 %v233, %v234
    %v237 = vstv %s113
    %v238 = vmul.f32 %v153, %v237
    %v239 = vmul.f32 %v154, %v237
    %v240 = vadd.f32 %v235, %v238
    %v241 = vadd.f32 %v236, %v239
    %v242 = vstv %s114
    %v243 = vmul.f32 %v157, %v242
    %v244 = vmul.f32 %v158, %v242
    %v245 = vadd.f32 %v240, %v243
    %v246 = vadd.f32 %v241, %v244
    %v247 = vstv %s115
    %v248 = vmul.f32 %v161, %v247
    %v249 = vmul.f32 %v162, %v247
    %v250 = vadd.f32 %v245, %v248
    %v251 = vadd.f32 %v246, %v249
    %v252 = vstv %s116
    %v253 = vmul.f32 %v165, %v252
    %v254 = vmul.f32 %v166, %v252
    %v255 = vadd.f32 %v250, %v253
    %v256 = vadd.f32 %v251, %v254
    %v257 = vstv %s117
    %v258 = vmul.f32 %v169, %v257
    %v259 = vmul.f32 %v170, %v257
    %v260 = vadd.f32 %v255, %v258
    %v261 = vadd.f32 %v256, %v259
    %v262 = vstv %s118
    %v263 = vmul.f32 %v173, %v262
    %v264 = vmul.f32 %v174, %v262
    %v265 = vadd.f32 %v260, %v263
    %v266 = vadd.f32 %v261, %v264
    %v267 = vstv %s119
    %v268 = vmul.f32 %v177, %v267
    %v269 = vmul.f32 %v178, %v267
    %v270 = vadd.f32 %v265, %v268
    %v271 = vadd.f32 %v266, %v269
    %v272 = vstv %s120
    %v273 = vmul.f32 %v181, %v272
    %v274 = vmul.f32 %v182, %v272
    %v275 = vadd.f32 %v270, %v273
    %v276 = vadd.f32 %v271, %v274
    %v277 = vmax.f32 %v275, 0.0
    %v278 = vmax.f32 %v276, 0.0
    %v279 = vstv %s121
    %v280 = vmul.f32 %v149, %v279
    %v281 = vmul.f32 %v150, %v279
    %v282 = vstv %s132
    %v283 = vadd.f32 %v280, %v282
    %v284 = vadd.f32 %v281, %v282
    %v285 = vstv %s122
    %v286 = vmul.f32 %v153, %v285
    %v287 = vmul.f32 %v154, %v285
    %v288 = vadd.f32 %v283, %v286
    %v289 = vadd.f32 %v284, %v287
    %v290 = vstv %s123
    %v291 = vmul.f32 %v157, %v290
    %v292 = vmul.f32 %v158, %v290
    %v293 = vadd.f32 %v288, %v291
    %v294 = vadd.f32 %v289, %v292
    %v295 = vstv %s124
    %v296 = vmul.f32 %v161, %v295
    %v297 = vmul.f32 %v162, %v295
    %v298 = vadd.f32 %v293, %v296
    %v299 = vadd.f32 %v294, %v297
    %v300 = vstv %s125
    %v301 = vmul.f32 %v165, %v300
    %v302 = vmul.f32 %v166, %v300
    %v303 = vadd.f32 %v298, %v301
    %v304 = vadd.f32 %v299, %v302
    %v305 = vstv %s126
    %v306 = vmul.f32 %v169, %v305
    %v307 = vmul.f32 %v170, %v305
    %v308 = vadd.f32 %v303, %v306
    %v309 = vadd.f32 %v304, %v307
    %v310 = vstv %s127
    %v311 = vmul.f32 %v173, %v310
    %v312 = vmul.f32 %v174, %v310
    %v313 = vadd.f32 %v308, %v311
    %v314 = vadd.f32 %v309, %v312
    %v315 = vstv %s128
    %v316 = vmul.f32 %v177, %v315
    %v317 = vmul.f32 %v178, %v315
    %v318 = vadd.f32 %v313, %v316
    %v319 = vadd.f32 %v314, %v317
    %v320 = vstv %s129
    %v321 = vmul.f32 %v181, %v320
    %v322 = vmul.f32 %v182, %v320
    %v323 = vadd.f32 %v318, %v321
    %v324 = vadd.f32 %v319, %v322
    %v325 = vmax.f32 %v323, 0.0
    %v326 = vmax.f32 %v324, 0.0
    %v327 = vstv %s133
    %v328 = vmul.f32 %v229, %v327
    %v329 = vmul.f32 %v230, %v327
    %v330 = vstv %s142
    %v331 = vadd.f32 %v328, %v330
    %v332 = vadd.f32 %v329, %v330
    %v333 = vstv %s134
    %v334 = vmul.f32 %v277, %v333
    %v335 = vmul.f32 %v278, %v333
    %v336 = vadd.f32 %v331, %v334
    %v337 = vadd.f32 %v332, %v335
    %v338 = vstv %s135
    %v339 = vmul.f32 %v325, %v338
    %v340 = vmul.f32 %v326, %v338
    %v341 = vadd.f32 %v336, %v339
    %v342 = vadd.f32 %v337, %v340
    %v343 = vmax.f32 %v341, 0.0
    %v344 = vmax.f32 %v342, 0.0
    %v345 = vstv %s136
    %v346 = vmul.f32 %v229, %v345
    %v347 = vmul.f32 %v230, %v345
    %v348 = vstv %s143
    %v349 = vadd.f32 %v346, %v348
    %v350 = vadd.f32 %v347, %v348
    %v351 = vstv %s137
    %v352 = vmul.f32 %v277, %v351
    %v353 = vmul.f32 %v278, %v351
    %v354 = vadd.f32 %v349, %v352
    %v355 = vadd.f32 %v350, %v353
    %v356 = vstv %s138
    %v357 = vmul.f32 %v325, %v356
    %v358 = vmul.f32 %v326, %v356
    %v359 = vadd.f32 %v354, %v357
    %v360 = vadd.f32 %v355, %v358
    %v361 = vmax.f32 %v359, 0.0
    %v362 = vmax.f32 %v360, 0.0
    %v363 = vstv %s139
    %v364 = vmul.f32 %v229, %v363
    %v365 = vmul.f32 %v230, %v363
    %v366 = vstv %s144
    %v367 = vadd.f32 %v364, %v366
    %v368 = vadd.f32 %v365, %v366
    %v369 = vstv %s140
    %v370 = vmul.f32 %v277, %v369
    %v371 = vmul.f32 %v278, %v369
    %v372 = vadd.f32 %v367, %v370
    %v373 = vadd.f32 %v368, %v371
    %v374 = vstv %s141
    %v375 = vmul.f32 %v325, %v374
    %v376 = vmul.f32 %v326, %v374
    %v377 = vadd.f32 %v372, %v375
    %v378 = vadd.f32 %v373, %v376
    %v379 = vmax.f32 %v377, 0.0
    %v380 = vmax.f32 %v378, 0.0
    %v381 = vstv %s145
    %v382 = vmul.f32 %v343, %v381
    %v383 = vmul.f32 %v344, %v381
    %v384 = vstv %s148
    %v385 = vadd.f32 %v382, %v384
    %v386 = vadd.f32 %v383, %v384
    %v387 = vstv %s146
    %v388 = vmul.f32 %v361, %v387
    %v389 = vmul.f32 %v362, %v387
    %v390 = vadd.f32 %v385, %v388
    %v391 = vadd.f32 %v386, %v389
    %v392 = vstv %s147
    %v393 = vmul.f32 %v379, %v392
    %v394 = vmul.f32 %v380, %v392
    %v395 = vadd.f32 %v390, %v393
    %v396 = vadd.f32 %v391, %v394
    %397 = vst [vmem:[#allocation14] sm:$0xff] %v395
    %398 = vst [vmem:[#allocation14 + $0x8] sm:$0xff] %v396
    // Predicated region
    $region54: #{tpu_custom_call.1} parent=1 // pred_check
      _
    $region55: #{tpu_custom_call.1} parent=1 // pred_check_branch
      %400 = sbr.rel (0) target = $region57
    $region56: #{tpu_custom_call.1} parent=1 // pred_region
      %402 = vsyncadd [#allocation5], 0
      %s403 = sshll.u32 [#allocation14], 4
      %s404 = int_to_ptr.vmem [resolvable:$true] %s403
      %s405 = sshll.u32 %s7, 4
      %s406 = int_to_ptr.hbm [resolvable:$true] %s405
      %411 = dma.vmem_to_hbm [thread:$0]  %s404, 256, %s406, [#allocation5], 128, 128, 8
    $region57: #{tpu_custom_call.1} parent=1 // pred_fallthru
      _
    // Predicated region
    $region58: #{tpu_custom_call.1} parent=1 // pred_check
      _
    $region59: #{tpu_custom_call.1} parent=1 // pred_check_branch
      %413 = sbr.rel (0) target = $region61
    $region60: #{tpu_custom_call.1} parent=1 // pred_region
      %415 = dma.done [#allocation5], 256
    $region61: #{tpu_custom_call.1} parent=1 // pred_fallthru
      _
    %416 = vsyncpa [#allocation4], 1
    %417 = vsyncpa [#allocation5], 1
    %418 = vsyncpa [#allocation6], 1
    %419 = vsyncpa [#allocation9], 1
    %420 = vsyncpa [#allocation12], 1

</llo_original>
